<compile_context>
chip_gen: v7x
topology: tpu7x:2x2x1
jax: 0.10.0
libtpu: 0.0.40
codegen_flags: <defaults>
</compile_context>

<pallas_src>
import math

import jax
import jax.numpy as jnp
from jax import lax
from jax.experimental import pallas as pl
from jax.experimental.pallas import tpu as pltpu


_VMEM_BUDGET_BYTES = 12 * 1024 * 1024   # per-step estimate (double-buffered in/out + scratch)
_VMEM_LIMIT_BYTES = 32 * 1024 * 1024    # <= physical VMEM on v5e/v6e/v7x; >= every default


def _round_up(x, m):
    return (x + m - 1) // m * m


def _vmem_block_bytes(shape, itemsize):
    """(8,128)-padded VMEM footprint of one buffer of `shape`."""
    *major, sub, lane = shape
    return math.prod(major) * _round_up(sub, 8) * _round_up(lane, 128) * itemsize


def _per_step_vmem_bytes(C, H, wt, itemsize):
    in_b = _vmem_block_bytes((1, C, H, wt), itemsize)      # input block
    out_b = _vmem_block_bytes((1, wt, H * C), itemsize)    # output block (lane-dense)
    scr_b = _vmem_block_bytes((H * C, wt), itemsize)       # interleave scratch
    return 2 * in_b + 2 * out_b + scr_b                    # in/out are double-buffered


def _pick_w_tile(N, C, H, W, itemsize, budget_bytes):
    """Choose (w_tile, padded_W) under the per-step VMEM budget."""
    if W % 128 != 0:
        if _per_step_vmem_bytes(C, H, W, itemsize) <= budget_bytes:
            return W, W                                    # full-W block fits: no padding
        # TODO(synk): padding costs an extra HBM pass on the input; a masked
        # ragged-tail kernel would avoid it.
        W = _round_up(W, 128)
    cands = sorted((w for w in range(128, W + 1, 128) if W % w == 0), reverse=True)
    wt = next((w for w in cands
               if _per_step_vmem_bytes(C, H, w, itemsize) <= budget_bytes),
              cands[-1])
    # v7x megacore: keep >= 2 pipelined grid steps per TensorCore when possible.
    while N * (W // wt) < 4 and wt % 256 == 0:
        wt //= 2
    return wt, W


def _make_kernel(C, H, wt):
    n_grp = H // 8                 # 8 input rows per pipelined-loop iteration
    tail0 = n_grp * 8              # statically handled ragged tail (H % 8 rows)

    def kernel(x_ref, o_ref, s_ref):
        # x_ref: (1, C, H, wt)   o_ref: (1, wt, H*C)   s_ref: (H*C, wt)
        # Step 1: sublane-side channel interleave, S[i*C + c, :] = x[c, i, :].
        def group(it, carry):
            i0 = pl.multiple_of(it * 8, 8)                  # 8-aligned row offset
            blk = x_ref[0, :, pl.ds(i0, 8), :]              # (C, 8, wt), aligned load
            piece = jnp.concatenate([blk[:, t, :] for t in range(8)], axis=0)
            s_ref[pl.ds(pl.multiple_of(it * 8 * C, 8 * C), 8 * C), :] = piece
            return carry

        if n_grp > 0:
            lax.fori_loop(0, n_grp, group, 0, unroll=min(8, n_grp))
        for i in range(tail0, H):                           # static offsets; masked store OK
            s_ref[pl.ds(i * C, C), :] = x_ref[0, :, i, :]

        # Step 2: one dense 2-D transpose; whole block stored with unmasked vst's.
        o_ref[0] = jnp.transpose(s_ref[...], (1, 0)).astype(o_ref.dtype)

    return kernel


def patch_embed(x, patch_size=1, w_tile=None, vmem_budget_bytes=_VMEM_BUDGET_BYTES):
    """Pallas implementation of PatchEmbed.forward. Returns (out, ori_shape)."""
    N, C, H, W = ori_shape = x.shape
    p = patch_size
    if p != 1:
        # TODO(synk): general patch_size > 1 path (flatten order (C, ph, pw));
        # the module default (and the IllTr usage) is patch_size = 1.
        raise NotImplementedError("patch_size > 1 not implemented")
    num_patches = (H // p) * (W // p)
    dim = p * p * C
    itemsize = x.dtype.itemsize

    if w_tile is None:
        wt, Wp = _pick_w_tile(N, C, H, W, itemsize, vmem_budget_bytes)
    else:
        wt, Wp = int(w_tile), W
        if not (W % wt == 0 and (wt % 128 == 0 or wt == W)):
            raise ValueError("w_tile must divide W and be a multiple of 128 (or == W)")
        if _per_step_vmem_bytes(C, H, wt, itemsize) > vmem_budget_bytes:
            raise ValueError("w_tile exceeds the per-step VMEM budget")

    if Wp != W:   # pad W so 128-wide tiles are legal; padded columns sliced off below
        x = jnp.pad(x, ((0, 0), (0, 0), (0, 0), (0, Wp - W)))

    out_flat = pl.pallas_call(
        _make_kernel(C, H, wt),
        out_shape=jax.ShapeDtypeStruct((N, Wp, H * C), x.dtype),
        grid=(N, Wp // wt),
        in_specs=[pl.BlockSpec((1, C, H, wt), lambda n, w: (n, 0, 0, w))],
        out_specs=pl.BlockSpec((1, wt, H * C), lambda n, w: (n, w, 0)),
        scratch_shapes=[pltpu.VMEM((H * C, wt), x.dtype)],
        compiler_params=pltpu.CompilerParams(
            dimension_semantics=("parallel", "parallel"),
            vmem_limit_bytes=_VMEM_LIMIT_BYTES),
    )(x)

    # Free re-view: (N, W, H*C) row-major == (N, W*H, C) row-major.  Padded
    # columns (j >= W) sit at the tail of the patch axis and are sliced off.
    out = out_flat[:, :W, :].reshape(N, num_patches, dim)
    # NOTE: the PyTorch module always returns float32 (torch.zeros default); we
    # keep x.dtype, which is identical for the f32 inputs used here.
    return out, ori_shape


if __name__ == "__main__":
    key = jax.random.PRNGKey(0)
    k1, k2 = jax.random.split(key)

    # Case 1: small shapes consistent with the module (batch=2, C=4, 16x16).
    x = jax.random.normal(k1, (2, 4, 16, 16), dtype=jnp.float32)
    out, ori_shape = patch_embed(x, patch_size=1)
    out = jax.block_until_ready(out)
    N, C, H, W = x.shape
    # Reference replicating the PyTorch loop (p=1, H==W): out[n, j*H+i, c] = x[n, c, i, j].
    ref = jnp.transpose(x, (0, 3, 2, 1)).reshape(N, W * H, C)
    assert out.shape == (N, H * W, C)
    assert ori_shape == x.shape
    assert jnp.array_equal(out, ref)

    # Case 2: exercises the W-tiled pipelined grid, the fori interleave loop and
    # the lane-dense (H*C = 512) output path.
    x2 = jax.random.normal(k2, (1, 2, 256, 256), dtype=jnp.float32)
    out2, ori_shape2 = patch_embed(x2, patch_size=1, w_tile=128)
    out2 = jax.block_until_ready(out2)
    N2, C2, H2, W2 = x2.shape
    ref2 = jnp.transpose(x2, (0, 3, 2, 1)).reshape(N2, W2 * H2, C2)
    assert ori_shape2 == x2.shape
    assert jnp.array_equal(out2, ref2)

    print("KERNEL_OK")
</pallas_src>

<mosaic_0001>
module attributes {stable_mosaic.version = 11 : i64} {
  func.func @kernel(%arg0: i32, %arg1: i32, %arg2: memref<1x4x16x16xf32, #tpu.memory_space<vmem>>, %arg3: memref<1x16x64xf32, #tpu.memory_space<vmem>>, %arg4: memref<64x16xf32, #tpu.memory_space<vmem>>) attributes {dimension_semantics = [#tpu.dimension_semantics<parallel>, #tpu.dimension_semantics<parallel>], iteration_bounds = array<i64: 2, 1>, scalar_prefetch = 0 : i64, scratch_operands = 1 : i64, tpu.core_type = #tpu.core_type<tc>, window_params = [{transform_indices = @transform_0, window_bounds = array<i64: 1, 4, 16, 16>}, {transform_indices = @transform_1, window_bounds = array<i64: 1, 16, 64>}]} {
    %c0_i32 = arith.constant 0 : i32
    %c8_i32 = arith.constant 8 : i32
    %0 = arith.muli %c0_i32, %c8_i32 : i32
    %1 = tpu.assume_multiple %0, 8 : i32
    %c0 = arith.constant 0 : index
    %c0_0 = arith.constant 0 : index
    %2 = arith.index_cast %1 : i32 to index
    %c0_1 = arith.constant 0 : index
    %3 = vector.load %arg2[%c0, %c0_0, %2, %c0_1] : memref<1x4x16x16xf32, #tpu.memory_space<vmem>>, vector<1x4x8x16xf32>
    %4 = vector.shape_cast %3 : vector<1x4x8x16xf32> to vector<4x8x16xf32>
    %5 = vector.extract_strided_slice %4 {offsets = [0, 0, 0], sizes = [4, 1, 16], strides = [1, 1, 1]} : vector<4x8x16xf32> to vector<4x1x16xf32>
    %6 = vector.shape_cast %5 : vector<4x1x16xf32> to vector<4x16xf32>
    %7 = vector.extract_strided_slice %4 {offsets = [0, 1, 0], sizes = [4, 1, 16], strides = [1, 1, 1]} : vector<4x8x16xf32> to vector<4x1x16xf32>
    %8 = vector.shape_cast %7 : vector<4x1x16xf32> to vector<4x16xf32>
    %9 = vector.extract_strided_slice %4 {offsets = [0, 2, 0], sizes = [4, 1, 16], strides = [1, 1, 1]} : vector<4x8x16xf32> to vector<4x1x16xf32>
    %10 = vector.shape_cast %9 : vector<4x1x16xf32> to vector<4x16xf32>
    %11 = vector.extract_strided_slice %4 {offsets = [0, 3, 0], sizes = [4, 1, 16], strides = [1, 1, 1]} : vector<4x8x16xf32> to vector<4x1x16xf32>
    %12 = vector.shape_cast %11 : vector<4x1x16xf32> to vector<4x16xf32>
    %13 = vector.extract_strided_slice %4 {offsets = [0, 4, 0], sizes = [4, 1, 16], strides = [1, 1, 1]} : vector<4x8x16xf32> to vector<4x1x16xf32>
    %14 = vector.shape_cast %13 : vector<4x1x16xf32> to vector<4x16xf32>
    %15 = vector.extract_strided_slice %4 {offsets = [0, 5, 0], sizes = [4, 1, 16], strides = [1, 1, 1]} : vector<4x8x16xf32> to vector<4x1x16xf32>
    %16 = vector.shape_cast %15 : vector<4x1x16xf32> to vector<4x16xf32>
    %17 = vector.extract_strided_slice %4 {offsets = [0, 6, 0], sizes = [4, 1, 16], strides = [1, 1, 1]} : vector<4x8x16xf32> to vector<4x1x16xf32>
    %18 = vector.shape_cast %17 : vector<4x1x16xf32> to vector<4x16xf32>
    %19 = vector.extract_strided_slice %4 {offsets = [0, 7, 0], sizes = [4, 1, 16], strides = [1, 1, 1]} : vector<4x8x16xf32> to vector<4x1x16xf32>
    %20 = vector.shape_cast %19 : vector<4x1x16xf32> to vector<4x16xf32>
    %21 = tpu.concatenate %6, %8, %10, %12, %14, %16, %18, %20 in 0 : vector<4x16xf32>, vector<4x16xf32>, vector<4x16xf32>, vector<4x16xf32>, vector<4x16xf32>, vector<4x16xf32>, vector<4x16xf32>, vector<4x16xf32> -> vector<32x16xf32>
    %c8_i32_2 = arith.constant 8 : i32
    %22 = arith.muli %c0_i32, %c8_i32_2 : i32
    %c4_i32 = arith.constant 4 : i32
    %23 = arith.muli %22, %c4_i32 : i32
    %24 = tpu.assume_multiple %23, 32 : i32
    %25 = arith.index_cast %24 : i32 to index
    %c0_3 = arith.constant 0 : index
    %26 = vector.load %arg4[%25, %c0_3] : memref<64x16xf32, #tpu.memory_space<vmem>>, vector<32x16xf32>
    tpu.vector_store %arg4[%25, %c0_3], %21 {strides = array<i32>} : memref<64x16xf32, #tpu.memory_space<vmem>>, vector<32x16xf32>,
    %c1_i32 = arith.constant 1 : i32
    %c8_i32_4 = arith.constant 8 : i32
    %27 = arith.muli %c1_i32, %c8_i32_4 : i32
    %28 = tpu.assume_multiple %27, 8 : i32
    %c0_5 = arith.constant 0 : index
    %c0_6 = arith.constant 0 : index
    %29 = arith.index_cast %28 : i32 to index
    %c0_7 = arith.constant 0 : index
    %30 = vector.load %arg2[%c0_5, %c0_6, %29, %c0_7] : memref<1x4x16x16xf32, #tpu.memory_space<vmem>>, vector<1x4x8x16xf32>
    %31 = vector.shape_cast %30 : vector<1x4x8x16xf32> to vector<4x8x16xf32>
    %32 = vector.extract_strided_slice %31 {offsets = [0, 0, 0], sizes = [4, 1, 16], strides = [1, 1, 1]} : vector<4x8x16xf32> to vector<4x1x16xf32>
    %33 = vector.shape_cast %32 : vector<4x1x16xf32> to vector<4x16xf32>
    %34 = vector.extract_strided_slice %31 {offsets = [0, 1, 0], sizes = [4, 1, 16], strides = [1, 1, 1]} : vector<4x8x16xf32> to vector<4x1x16xf32>
    %35 = vector.shape_cast %34 : vector<4x1x16xf32> to vector<4x16xf32>
    %36 = vector.extract_strided_slice %31 {offsets = [0, 2, 0], sizes = [4, 1, 16], strides = [1, 1, 1]} : vector<4x8x16xf32> to vector<4x1x16xf32>
    %37 = vector.shape_cast %36 : vector<4x1x16xf32> to vector<4x16xf32>
    %38 = vector.extract_strided_slice %31 {offsets = [0, 3, 0], sizes = [4, 1, 16], strides = [1, 1, 1]} : vector<4x8x16xf32> to vector<4x1x16xf32>
    %39 = vector.shape_cast %38 : vector<4x1x16xf32> to vector<4x16xf32>
    %40 = vector.extract_strided_slice %31 {offsets = [0, 4, 0], sizes = [4, 1, 16], strides = [1, 1, 1]} : vector<4x8x16xf32> to vector<4x1x16xf32>
    %41 = vector.shape_cast %40 : vector<4x1x16xf32> to vector<4x16xf32>
    %42 = vector.extract_strided_slice %31 {offsets = [0, 5, 0], sizes = [4, 1, 16], strides = [1, 1, 1]} : vector<4x8x16xf32> to vector<4x1x16xf32>
    %43 = vector.shape_cast %42 : vector<4x1x16xf32> to vector<4x16xf32>
    %44 = vector.extract_strided_slice %31 {offsets = [0, 6, 0], sizes = [4, 1, 16], strides = [1, 1, 1]} : vector<4x8x16xf32> to vector<4x1x16xf32>
    %45 = vector.shape_cast %44 : vector<4x1x16xf32> to vector<4x16xf32>
    %46 = vector.extract_strided_slice %31 {offsets = [0, 7, 0], sizes = [4, 1, 16], strides = [1, 1, 1]} : vector<4x8x16xf32> to vector<4x1x16xf32>
    %47 = vector.shape_cast %46 : vector<4x1x16xf32> to vector<4x16xf32>
    %48 = tpu.concatenate %33, %35, %37, %39, %41, %43, %45, %47 in 0 : vector<4x16xf32>, vector<4x16xf32>, vector<4x16xf32>, vector<4x16xf32>, vector<4x16xf32>, vector<4x16xf32>, vector<4x16xf32>, vector<4x16xf32> -> vector<32x16xf32>
    %c8_i32_8 = arith.constant 8 : i32
    %49 = arith.muli %c1_i32, %c8_i32_8 : i32
    %c4_i32_9 = arith.constant 4 : i32
    %50 = arith.muli %49, %c4_i32_9 : i32
    %51 = tpu.assume_multiple %50, 32 : i32
    %52 = arith.index_cast %51 : i32 to index
    %c0_10 = arith.constant 0 : index
    %53 = vector.load %arg4[%52, %c0_10] : memref<64x16xf32, #tpu.memory_space<vmem>>, vector<32x16xf32>
    tpu.vector_store %arg4[%52, %c0_10], %48 {strides = array<i32>} : memref<64x16xf32, #tpu.memory_space<vmem>>, vector<32x16xf32>,
    %c2_i32 = arith.constant 2 : i32
    %c0_11 = arith.constant 0 : index
    %c0_12 = arith.constant 0 : index
    %54 = vector.load %arg4[%c0_11, %c0_12] : memref<64x16xf32, #tpu.memory_space<vmem>>, vector<64x16xf32>
    %55 = tpu.transpose %54, [1, 0] : vector<64x16xf32> -> vector<16x64xf32>
    %c0_13 = arith.constant 0 : index
    %c0_14 = arith.constant 0 : index
    %c0_15 = arith.constant 0 : index
    %56 = vector.load %arg3[%c0_13, %c0_14, %c0_15] : memref<1x16x64xf32, #tpu.memory_space<vmem>>, vector<1x16x64xf32>
    %57 = vector.shape_cast %56 : vector<1x16x64xf32> to vector<16x64xf32>
    %58 = vector.shape_cast %55 : vector<16x64xf32> to vector<1x16x64xf32>
    tpu.vector_store %arg3[%c0_13, %c0_14, %c0_15], %58 {strides = array<i32>} : memref<1x16x64xf32, #tpu.memory_space<vmem>>, vector<1x16x64xf32>,
    return
  }
  func.func @transform_0(%arg0: i32, %arg1: i32) -> (i32, i32, i32, i32) {
    %c0_i32 = arith.constant 0 : i32
    %c0_i32_0 = arith.constant 0 : i32
    %c0_i32_1 = arith.constant 0 : i32
    return %arg0, %c0_i32, %c0_i32_0, %arg1 : i32, i32, i32, i32
  }
  func.func @transform_1(%arg0: i32, %arg1: i32) -> (i32, i32, i32) {
    %c0_i32 = arith.constant 0 : i32
    %c0_i32_0 = arith.constant 0 : i32
    return %arg0, %arg1, %c0_i32 : i32, i32, i32
  }
}

</mosaic_0001>

<llo_original>
// kernel: tpu_custom_call.1
$region0: #{tpu_custom_call.1}
  #allocation0 [shape = 'u32[]', space=smem, size = 0x4, offset = 0x4, fixed_abs, tag = 'smem constant byte address 0x4 - core index']
  #allocation1 [shape = 'u32[144,128]{1,0:T(1,128)}', space=vmem, size = 0x12000, scoped, tag = 'internal scratch']
  #allocation2 [shape = 'f32[64,16]{1,0:T(8,128)}', space=vmem, size = 0x8000, scoped, tag = 'scratch operand']
  %s0 = inlined_call_operand.hbm [shape: f32[2,4,16,16], index: 0, kind: input, shape index: {}]
  %s1 = inlined_call_operand.hbm [shape: f32[2,16,64], index: 1, kind: output, shape index: {}]
  %s2 = sld [smem:[#allocation0]]
  $region41: #{tpu_custom_call.1} parent=0
    _
  %s4 = ssub.s32 1, %s2
  %s5 = scalar_select 0, %s4, %s2
  $region1: #{tpu_custom_call.1} parent=0
    #allocation3 [shape = 'u8[65536]{0}', space=vmem, size = 0x10000, scoped, tag = 'input window, operand 0']
    #allocation4 [shape = 's32[2]{0}', space=sflag, size = 0x8, scoped, tag = 'scoped memory for tpu_custom_call.1']
    #allocation5 [shape = 's32[2]{0}', space=sflag, size = 0x8, scoped, tag = 'scoped memory for tpu_custom_call.1']
    #allocation6 [shape = 'u8[16384]{0}', space=vmem, size = 0x4000, scoped, tag = 'output window, operand 0']
    %6 = vsyncpa [#allocation4], 0
    %s7 = scalar_lea.sflag [#allocation4], 1
    %8 = vsyncpa %s7, 0
    %9 = vsyncpa [#allocation5], 0
    %s10 = scalar_lea.sflag [#allocation5], 1
    %11 = vsyncpa %s10, 0
    loop: start=0, step=1, limit=4
    $region2: #{tpu_custom_call.1} parent=1 // loop_pre_header
      _
    $region3: #{tpu_custom_call.1} parent=1 // loop_header
      %s13 = sphi 0, %s17
      %p14 = scmp.ge.s32.totalorder %s13, 4
      %s20 = sphi 0, %s32
      %s21 = sphi 0, %s28
      %s22 = sphi 0, %s20
      %s23 = sphi 0, %s21
      %s24 = sphi 0, %s22
      %s25 = sphi 0, %s23
      %s37 = sphi 0, %s39
      %s40 = sphi 0, %s37
      %s41 = sphi 0, %s40
      %s57 = sphi 0, %s41
      %s65 = sphi 0, %s67
      %s68 = sphi 0, %s65
      %s69 = sphi 0, %s68
      %s85 = sphi 0, %s69
    $region4: #{tpu_custom_call.1} parent=1 // loop_header_branch
      %16 = sbr.rel (%p14) target = $region8
    $region5: #{tpu_custom_call.1} parent=1 // loop_body
      %s18 = ssub.s32 %s13, 1
      %s19 = ssub.s32 %s13, 2
      %s26 = sadd.s32 1, %s21
      %p27 = scmp.ge.s32.totalorder %s26, 1
      %s28 = scalar_select %p27, 0, %s26
      %s29 = sadd.s32 1, %s20
      %s30 = scalar_select %p27, %s29, %s20
      %p31 = scmp.ge.s32.totalorder %s30, 2
      %s32 = scalar_select %p31, 0, %s30
      %s33 = ssub.s32 %s20, %s32
      %s34 = ssub.s32 %s21, %s28
      %s35 = sor.u32 %s33, %s34
      %p36 = scmp.eq.s32.totalorder %s35, 0
      %s38 = sadd.s32 %s37, 1
      %s39 = scalar_select %p36, %s37, %s38
      %p42 = pneg %p36
      %p43 = scmp.eq.s32.totalorder %s13, 1
      %p44 = por %p42, %p43
      %p45 = scmp.ne.s32.totalorder %s37, %s40
      %p46 = scmp.eq.s32.totalorder %s13, 0
      %p47 = por %p45, %p46
      %p48 = scmp.ne.s32.totalorder %s37, %s40
      %p49 = scmp.eq.s32.totalorder %s18, 1
      %p50 = por %p48, %p49
      %p51 = scmp.ne.s32.totalorder %s40, %s41
      %p52 = scmp.eq.s32.totalorder %s18, 0
      %p53 = por %p51, %p52
      %p54 = scmp.ne.s32.totalorder %s40, %s41
      %p55 = scmp.eq.s32.totalorder %s19, 1
      %p56 = por %p54, %p55
      %p58 = scmp.ne.s32.totalorder %s41, %s57
      %p59 = scmp.eq.s32.totalorder %s19, 0
      %p60 = por %p58, %p59
      %s61 = ssub.s32 %s20, %s32
      %s62 = ssub.s32 %s21, %s28
      %s63 = sor.u32 %s61, %s62
      %p64 = scmp.eq.s32.totalorder %s63, 0
      %s66 = sadd.s32 %s65, 1
      %s67 = scalar_select %p64, %s65, %s66
      %p70 = pneg %p64
      %p71 = scmp.eq.s32.totalorder %s13, 1
      %p72 = por %p70, %p71
      %p73 = scmp.ne.s32.totalorder %s65, %s68
      %p74 = scmp.eq.s32.totalorder %s13, 0
      %p75 = por %p73, %p74
      %p76 = scmp.ne.s32.totalorder %s65, %s68
      %p77 = scmp.eq.s32.totalorder %s18, 1
      %p78 = por %p76, %p77
      %p79 = scmp.ne.s32.totalorder %s68, %s69
      %p80 = scmp.eq.s32.totalorder %s18, 0
      %p81 = por %p79, %p80
      %p82 = scmp.ne.s32.totalorder %s68, %s69
      %p83 = scmp.eq.s32.totalorder %s19, 1
      %p84 = por %p82, %p83
      %p86 = scmp.ne.s32.totalorder %s69, %s85
      %p87 = scmp.eq.s32.totalorder %s19, 0
      %p88 = por %p86, %p87
      %p89 = scmp.le.s32.totalorder 1, %s13
      %p90 = scmp.lt.s32.totalorder %s13, 3
      %p91 = pnand %p89, %p90
      %p92 = pneg %p91
      // Predicated region
      $region9: #{tpu_custom_call.1} parent=5 // pred_check
        _
      $region10: #{tpu_custom_call.1} parent=5 // pred_check_branch
        %94 = sbr.rel (%p91) target = $region12
      $region11: #{tpu_custom_call.1} parent=5 // pred_region
        %s95 = ssub.s32 %s13, 1
      $region12: #{tpu_custom_call.1} parent=5 // pred_fallthru
        _
      %p96 = scmp.lt.s32.totalorder %s13, 2
      // Predicated region
      $region13: #{tpu_custom_call.1} parent=5 // pred_check
        %p97 = pneg %p96
      $region14: #{tpu_custom_call.1} parent=5 // pred_check_branch
        %99 = sbr.rel (%p97) target = $region16
      $region15: #{tpu_custom_call.1} parent=5 // pred_region
        // Predicated region
        $region17: #{tpu_custom_call.1} parent=15 // pred_check
          %p100 = pneg %p47
        $region18: #{tpu_custom_call.1} parent=15 // pred_check_branch
          %102 = sbr.rel (%p100) target = $region20
        $region19: #{tpu_custom_call.1} parent=15 // pred_region
          %s103 = sand.u32 %s37, 1
          %s104 = scalar_lea.sflag [#allocation4], %s103
          %s105 = sand.u32 %s37, 1
          %s106 = smul.addr %s105, 64
          %s107 = scalar_lea.vmem [#allocation3], %s106
          %s109 = ssub.s32 1024, 1024
          %110 = vsyncadd %s104, %s109
          %s111 = smul.addr %s20, 8
          %s112 = sadd.s32 %s21, %s111
          %s113 = smul.addr %s112, 128
          %s114 = scalar_lea.hbm %s0, %s113
          %s115 = sshll.u32 %s107, 4
          %s116 = int_to_ptr.vmem [resolvable:$true] %s115
          %121 = dma.hbm_to_vmem [thread:$0]  %s114, 1024, %s116, %s104, 128, 128, 8
        $region20: #{tpu_custom_call.1} parent=15 // pred_fallthru
          _
      $region16: #{tpu_custom_call.1} parent=5 // pred_fallthru
        _
      %p122 = scmp.le.s32.totalorder 1, %s13
      %p123 = scmp.lt.s32.totalorder %s13, 3
      %p124 = pnand %p122, %p123
      %p125 = pneg %p124
      // Predicated region
      $region21: #{tpu_custom_call.1} parent=5 // pred_check
        _
      $region22: #{tpu_custom_call.1} parent=5 // pred_check_branch
        %127 = sbr.rel (%p124) target = $region24
      $region23: #{tpu_custom_call.1} parent=5 // pred_region
        %s128 = ssub.s32 %s13, 1
        %s129 = sand.u32 %s40, 1
        %s130 = scalar_lea.sflag [#allocation4], %s129
        %s131 = sand.u32 %s40, 1
        %s132 = smul.addr %s131, 64
        %s133 = scalar_lea.vmem [#allocation3], %s132
        // Predicated region
        $region25: #{tpu_custom_call.1} parent=23 // pred_check
          %p134 = pneg %p53
        $region26: #{tpu_custom_call.1} parent=23 // pred_check_branch
          %136 = sbr.rel (%p134) target = $region28
        $region27: #{tpu_custom_call.1} parent=23 // pred_region
          %137 = dma.done %s130, 1024
        $region28: #{tpu_custom_call.1} parent=23 // pred_fallthru
          _
        %s138 = sand.u32 %s40, 1
        %s139 = scalar_lea.sflag [#allocation4], %s138
        %s140 = sand.u32 %s40, 1
        %s141 = smul.addr %s140, 64
        %s142 = scalar_lea.vmem [#allocation3], %s141
        %p143 = pneg %p53
        %p144 = pneg %p50
        %p145 = pneg %p81
        %p146 = pneg %p78
        %s147 = sand.u32 %s68, 1
        %s148 = scalar_lea.sflag [#allocation5], %s147
        %s149 = sand.u32 %s68, 1
        %s150 = smul.addr %s149, 16
        %s151 = scalar_lea.vmem [#allocation6], %s150
        %s152 = smul.u32 2, %s23
        %v153 = vld [vmem:[%s133] sm:$0xff]
        %v154 = vld [vmem:[%s133 + $0x10] sm:$0xff]
        %v155 = vld [vmem:[%s133 + $0x20] sm:$0xff]
        %v156 = vld [vmem:[%s133 + $0x30] sm:$0xff]
        %v161 = vrot.slane %v154, 7
        %vm162 = vcmask 1041409
        %v163 = vsel %vm162, %v161, %v153
        %v164 = vrot.slane %v155, 6
        %vm165 = vcmask 1042434
        %v166 = vsel %vm165, %v164, %v163
        %v167 = vrot.slane %v156, 5
        %vm168 = vcmask 1043459
        %v169 = vsel %vm168, %v167, %v166
        %v171 = vrot.slane %v153, 5
        %v172 = vrot.slane %v154, 4
        %vm173 = vcmask 1045509
        %v174 = vsel %vm173, %v172, %v171
        %v175 = vrot.slane %v155, 3
        %vm176 = vcmask 1046534
        %v177 = vsel %vm176, %v175, %v174
        %v178 = vrot.slane %v156, 2
        %vm179 = vcmask 1047559
        %v180 = vsel %vm179, %v178, %v177
        %v182 = vrot.slane %v153, 2
        %v183 = vrot.slane %v154, 1
        %v184 = vsel %vm162, %v183, %v182
        %v185 = vsel %vm165, %v155, %v184
        %v186 = vrot.slane %v156, 7
        %v187 = vsel %vm168, %v186, %v185
        %v189 = vrot.slane %v153, 7
        %v190 = vrot.slane %v154, 6
        %v191 = vsel %vm173, %v190, %v189
        %v192 = vrot.slane %v155, 5
        %v193 = vsel %vm176, %v192, %v191
        %v194 = vrot.slane %v156, 4
        %v195 = vsel %vm179, %v194, %v193
        %v197 = vrot.slane %v153, 4
        %v198 = vrot.slane %v154, 3
        %v199 = vsel %vm162, %v198, %v197
        %v200 = vrot.slane %v155, 2
        %v201 = vsel %vm165, %v200, %v199
        %v202 = vrot.slane %v156, 1
        %v203 = vsel %vm168, %v202, %v201
        %v205 = vrot.slane %v153, 1
        %v206 = vsel %vm173, %v154, %v205
        %v207 = vrot.slane %v155, 7
        %v208 = vsel %vm176, %v207, %v206
        %v209 = vrot.slane %v156, 6
        %v210 = vsel %vm179, %v209, %v208
        %v212 = vrot.slane %v153, 6
        %v213 = vrot.slane %v154, 5
        %v214 = vsel %vm162, %v213, %v212
        %v215 = vrot.slane %v155, 4
        %v216 = vsel %vm165, %v215, %v214
        %v217 = vrot.slane %v156, 3
        %v218 = vsel %vm168, %v217, %v216
        %v220 = vrot.slane %v153, 3
        %v221 = vrot.slane %v154, 2
        %v222 = vsel %vm173, %v221, %v220
        %v223 = vrot.slane %v155, 1
        %v224 = vsel %vm176, %v223, %v222
        %v225 = vsel %vm179, %v156, %v224
        %vm227 = vcmask 1043456
        %v228 = vsel %vm227, %v169, %v180
        %v229 = vsel %vm227, %v187, %v195
        %v230 = vsel %vm227, %v203, %v210
        %v231 = vsel %vm227, %v218, %v225
        %vm232 = vcmask 130048
        %233 = vst.msk [vmem:[#allocation2] sm:$0xff] %vm232, %v228
        %234 = vst.msk [vmem:[#allocation2 + $0x8] sm:$0xff] %vm232, %v229
        %235 = vst.msk [vmem:[#allocation2 + $0x10] sm:$0xff] %vm232, %v230
        %236 = vst.msk [vmem:[#allocation2 + $0x18] sm:$0xff] %vm232, %v231
        %s237 = scalar_lea.vmem %s133, 8 [#allocation3]
        %v238 = vld [vmem:[%s237] sm:$0xff]
        %v239 = vld [vmem:[%s237 + $0x10] sm:$0xff]
        %v240 = vld [vmem:[%s237 + $0x20] sm:$0xff]
        %v241 = vld [vmem:[%s237 + $0x30] sm:$0xff]
        %v246 = vrot.slane %v239, 7
        %v247 = vsel %vm162, %v246, %v238
        %v248 = vrot.slane %v240, 6
        %v249 = vsel %vm165, %v248, %v247
        %v250 = vrot.slane %v241, 5
        %v251 = vsel %vm168, %v250, %v249
        %v253 = vrot.slane %v238, 5
        %v254 = vrot.slane %v239, 4
        %v255 = vsel %vm173, %v254, %v253
        %v256 = vrot.slane %v240, 3
        %v257 = vsel %vm176, %v256, %v255
        %v258 = vrot.slane %v241, 2
        %v259 = vsel %vm179, %v258, %v257
        %v261 = vrot.slane %v238, 2
        %v262 = vrot.slane %v239, 1
        %v263 = vsel %vm162, %v262, %v261
        %v264 = vsel %vm165, %v240, %v263
        %v265 = vrot.slane %v241, 7
        %v266 = vsel %vm168, %v265, %v264
        %v268 = vrot.slane %v238, 7
        %v269 = vrot.slane %v239, 6
        %v270 = vsel %vm173, %v269, %v268
        %v271 = vrot.slane %v240, 5
        %v272 = vsel %vm176, %v271, %v270
        %v273 = vrot.slane %v241, 4
        %v274 = vsel %vm179, %v273, %v272
        %v276 = vrot.slane %v238, 4
        %v277 = vrot.slane %v239, 3
        %v278 = vsel %vm162, %v277, %v276
        %v279 = vrot.slane %v240, 2
        %v280 = vsel %vm165, %v279, %v278
        %v281 = vrot.slane %v241, 1
        %v282 = vsel %vm168, %v281, %v280
        %v284 = vrot.slane %v238, 1
        %v285 = vsel %vm173, %v239, %v284
        %v286 = vrot.slane %v240, 7
        %v287 = vsel %vm176, %v286, %v285
        %v288 = vrot.slane %v241, 6
        %v289 = vsel %vm179, %v288, %v287
        %v291 = vrot.slane %v238, 6
        %v292 = vrot.slane %v239, 5
        %v293 = vsel %vm162, %v292, %v291
        %v294 = vrot.slane %v240, 4
        %v295 = vsel %vm165, %v294, %v293
        %v296 = vrot.slane %v241, 3
        %v297 = vsel %vm168, %v296, %v295
        %v299 = vrot.slane %v238, 3
        %v300 = vrot.slane %v239, 2
        %v301 = vsel %vm173, %v300, %v299
        %v302 = vrot.slane %v240, 1
        %v303 = vsel %vm176, %v302, %v301
        %v304 = vsel %vm179, %v241, %v303
        %v306 = vsel %vm227, %v251, %v259
        %v307 = vsel %vm227, %v266, %v274
        %v308 = vsel %vm227, %v282, %v289
        %v309 = vsel %vm227, %v297, %v304
        %s310 = scalar_lea.vmem [#allocation2], 32
        %311 = vst.msk [vmem:[%s310] sm:$0xff] %vm232, %v306
        %312 = vst.msk [vmem:[%s310 + $0x8] sm:$0xff] %vm232, %v307
        %313 = vst.msk [vmem:[%s310 + $0x10] sm:$0xff] %vm232, %v308
        %314 = vst.msk [vmem:[%s310 + $0x18] sm:$0xff] %vm232, %v309
        %v315 = vld [vmem:[#allocation2] sm:$0xff]
        %v316 = vld [vmem:[#allocation2 + $0x8] sm:$0xff]
        %v317 = vld [vmem:[#allocation2 + $0x10] sm:$0xff]
        %v318 = vld [vmem:[#allocation2 + $0x18] sm:$0xff]
        %v319 = vld [vmem:[#allocation2 + $0x20] sm:$0xff]
        %v320 = vld [vmem:[#allocation2 + $0x28] sm:$0xff]
        %v321 = vld [vmem:[#allocation2 + $0x30] sm:$0xff]
        %v322 = vld [vmem:[#allocation2 + $0x38] sm:$0xff]
        %323 = vxpose.xlu0.b32.start [1/16] %v315, 128
        %324 = vxpose.xlu0.b32.cont [2/16] %v316, 128
        %325 = vxpose.xlu0.b32.cont [3/16] %v317, 128
        %326 = vxpose.xlu0.b32.cont [4/16] %v318, 128
        %327 = vxpose.xlu0.b32.cont [5/16] %v319, 128
        %328 = vxpose.xlu0.b32.cont [6/16] %v320, 128
        %329 = vxpose.xlu0.b32.cont [7/16] %v321, 128
        %330 = vxpose.xlu0.b32.cont [8/16] %v322, 128
        %331 = vxpose.xlu0.b32.cont [9/16] 0.0, 128
        %332 = vxpose.xlu0.b32.cont [10/16] 0.0, 128
        %333 = vxpose.xlu0.b32.cont [11/16] 0.0, 128
        %334 = vxpose.xlu0.b32.cont [12/16] 0.0, 128
        %335 = vxpose.xlu0.b32.cont [13/16] 0.0, 128
        %336 = vxpose.xlu0.b32.cont [14/16] 0.0, 128
        %337 = vxpose.xlu0.b32.cont [15/16] 0.0, 128
        %338 = vxpose.xlu0.b32.end [16/16] 0.0, 128
        %v339 = vpop.trf.xlu0
        %v340 = vpop.trf.xlu0
        %v341 = vpop.trf.xlu0
        %v342 = vpop.trf.xlu0
        %v343 = vpop.trf.xlu0
        %v344 = vpop.trf.xlu0
        %v345 = vpop.trf.xlu0
        %v346 = vpop.trf.xlu0
        %v347 = vpop.trf.xlu0
        %v348 = vpop.trf.xlu0
        %v349 = vpop.trf.xlu0
        %v350 = vpop.trf.xlu0
        %v351 = vpop.trf.xlu0
        %v352 = vpop.trf.xlu0
        %v353 = vpop.trf.xlu0
        %v354 = vpop.trf.xlu0
        %vm355 = vcmask 523264
        %356 = vst.msk [vmem:[%s151] sm:$0xff] %vm355, %v339
        %357 = vst.msk [vmem:[%s151 + $0x8] sm:$0xff] %vm355, %v340
        %s358 = sand.u32 %s68, 1
        %s359 = scalar_lea.sflag [#allocation5], %s358
        %s360 = sand.u32 %s68, 1
        %s361 = smul.addr %s360, 16
        %s362 = scalar_lea.vmem [#allocation6], %s361
        // Predicated region
        $region29: #{tpu_custom_call.1} parent=23 // pred_check
          %p363 = pneg %p78
        $region30: #{tpu_custom_call.1} parent=23 // pred_check_branch
          %365 = sbr.rel (%p363) target = $region32
        $region31: #{tpu_custom_call.1} parent=23 // pred_region
          %s366 = smul.u32 2, %s23
          %s368 = ssub.s32 256, 256
          %369 = vsyncadd %s359, %s368
          %s370 = smul.addr %s22, 2
          %s371 = sadd.s32 %s366, %s370
          %s372 = smul.addr %s371, 128
          %s373 = scalar_lea.hbm %s1, %s372
          %s374 = sshll.u32 %s362, 4
          %s375 = int_to_ptr.vmem [resolvable:$true] %s374
          %380 = dma.vmem_to_hbm [thread:$0]  %s375, 256, %s373, %s359, 128, 128, 8
        $region32: #{tpu_custom_call.1} parent=23 // pred_fallthru
          _
      $region24: #{tpu_custom_call.1} parent=5 // pred_fallthru
        _
      %p381 = scmp.le.s32.totalorder 2, %s13
      // Predicated region
      $region33: #{tpu_custom_call.1} parent=5 // pred_check
        %p382 = pneg %p381
      $region34: #{tpu_custom_call.1} parent=5 // pred_check_branch
        %384 = sbr.rel (%p382) target = $region36
      $region35: #{tpu_custom_call.1} parent=5 // pred_region
        %s385 = ssub.s32 %s13, 2
        // Predicated region
        $region37: #{tpu_custom_call.1} parent=35 // pred_check
          %p386 = pneg %p84
        $region38: #{tpu_custom_call.1} parent=35 // pred_check_branch
          %388 = sbr.rel (%p386) target = $region40
        $region39: #{tpu_custom_call.1} parent=35 // pred_region
          %s389 = sand.u32 %s69, 1
          %s390 = scalar_lea.sflag [#allocation5], %s389
          %s391 = sand.u32 %s69, 1
          %s392 = smul.addr %s391, 16
          %s393 = scalar_lea.vmem [#allocation6], %s392
          %394 = dma.done %s390, 256
        $region40: #{tpu_custom_call.1} parent=35 // pred_fallthru
          _
      $region36: #{tpu_custom_call.1} parent=5 // pred_fallthru
        _
    $region6: #{tpu_custom_call.1} parent=1 // loop_footer
      %s17 = sadd.s32 1, %s13
    $region7: #{tpu_custom_call.1} parent=1 // loop_footer_branch
      %12 = sbr.rel target = $region3
    $region8: #{tpu_custom_call.1} parent=1 // loop_exit
      _
    %395 = vsyncpa [#allocation4], 1
    %s396 = scalar_lea.sflag [#allocation4], 1
    %397 = vsyncpa %s396, 1
    %398 = vsyncpa [#allocation5], 1
    %s399 = scalar_lea.sflag [#allocation5], 1
    %400 = vsyncpa %s399, 1

</llo_original>
